<compile_context>
chip_gen: v5e
topology: v5e:2x2
jax: 0.10.0
libtpu: 0.0.40
codegen_flags: <defaults>
</compile_context>

<pallas_src>
import jax
import jax.numpy as jnp
from jax.experimental import pallas as pl
from jax.experimental.pallas import tpu as pltpu

# Largest batch tile, sized WITH (8,128) lane padding in mind:
#   f32 x tile (4096, 50) -> padded (4096, 128) = 2 MiB per buffer
#   f32 o tile (4096, 10) -> padded (4096, 128) = 2 MiB per buffer
#   3 x-buffers + 2 out-buffers + tiny resident W^T/bias  ~= 10 MiB  (< 16 MiB)
_TM_MAX = 4096
# Below this batch size a single tile already amortizes the per-step overhead;
# splitting only helps once there is enough work for two TensorCores / real
# DMA-compute overlap.
_SPLIT_MIN_BATCH = 4096


def _round_up(x, m):
    return ((x + m - 1) // m) * m


def _fc2_kernel(x_ref, wt_ref, b_ref, o_ref):
    # x_ref : (TM, 50)  VMEM   batch tile (f32 or bf16)
    # wt_ref: (50, 10)  VMEM   pre-transposed weight (resident, same dtype as x)
    # b_ref : (1, 10)   VMEM   bias row (f32)
    # o_ref : (TM, 10)  VMEM   f32 logits
    y = jnp.dot(x_ref[...], wt_ref[...], preferred_element_type=jnp.float32)
    o_ref[...] = (y + b_ref[...]).astype(o_ref.dtype)


def prepare_params(weight, bias, compute_dtype=jnp.float32):
    """One-time parameter prep (hoisted out of the per-call hot path).

    Args:
      weight: (10, 50) float32 (PyTorch nn.Linear layout).
      bias:   (10,)    float32.
      compute_dtype: dtype the MXU operands are streamed in (f32 or bf16).
                     Must match the dtype of the activations x.
    Returns:
      wt: (50, 10) compute_dtype, b2: (1, 10) float32.
    """
    return weight.T.astype(compute_dtype), bias.reshape(1, -1).astype(jnp.float32)


def lenet_server_side_forward(x, wt, b2, *, tile_rows=None):
    """Pallas implementation of LeNet_server_side.forward.

    Args:
      x:  (B, 50) activations from the client-side model (f32, or bf16 if the
          producer streams bf16 -- accumulation stays f32 either way).
      wt: (50, 10) pre-transposed weight (from prepare_params), dtype == x.dtype.
      b2: (1, 10)  float32 bias row (from prepare_params).
      tile_rows: optional override of the batch tile size (testing / tuning).
    Returns:
      (B, 10) float32 logits.
    """
    B, in_f = x.shape
    in_f2, out_f = wt.shape
    assert in_f == in_f2, (in_f, in_f2)
    assert x.dtype == wt.dtype, (x.dtype, wt.dtype)

    # Batch tiling.  Small B: one full-extent block (satisfies the (8,128) rule
    # by covering the whole array).  Large B: at least two multiple-of-8 tiles
    # (one per v7x TensorCore), capped at _TM_MAX so VMEM stays well under the
    # scoped default on every generation.  Partial last tiles are masked by
    # Pallas on the output side.
    if tile_rows is not None:
        tm = min(int(tile_rows), B)
    elif B < _SPLIT_MIN_BATCH:
        tm = B
    else:
        tm = min(_TM_MAX, _round_up(pl.cdiv(B, 2), 8))

    num_tiles = pl.cdiv(B, tm)
    grid = (num_tiles,)

    # Keep the DMA engine a tile ahead when the x stream is actually tiled
    # (mainly pays off on v7x's 3.2 TB/s HBM; harmless elsewhere).
    x_spec_kwargs = {}
    if num_tiles >= 2:
        x_spec_kwargs["pipeline_mode"] = pl.Buffered(3)

    itemsize_x = jnp.dtype(x.dtype).itemsize
    cost = pl.CostEstimate(
        flops=2 * B * in_f * out_f,
        transcendentals=0,
        bytes_accessed=(itemsize_x * (B * in_f + in_f * out_f)
                        + 4 * (B * out_f + out_f)),
    )

    return pl.pallas_call(
        _fc2_kernel,
        out_shape=jax.ShapeDtypeStruct((B, out_f), jnp.float32),
        grid=grid,
        in_specs=[
            pl.BlockSpec((tm, in_f), lambda i: (i, 0), **x_spec_kwargs),  # x: batch-tiled stream
            pl.BlockSpec((in_f, out_f), lambda i: (0, 0)),                # W^T: resident
            pl.BlockSpec((1, out_f), lambda i: (0, 0)),                   # bias: resident
        ],
        out_specs=pl.BlockSpec((tm, out_f), lambda i: (i, 0)),
        compiler_params=pltpu.CompilerParams(
            dimension_semantics=("parallel",),   # v7x: shard batch tiles over 2 TCs
        ),
        cost_estimate=cost,
    )(x, wt, b2)


def _reference_forward(x, weight, bias):
    return x.astype(jnp.float32) @ weight.T + bias


if __name__ == "__main__":
    key = jax.random.PRNGKey(0)
    k_x, k_w, k_b, k_x2 = jax.random.split(key, 4)

    IN_F, OUT_F = 50, 10

    # Deterministic synthetic parameters (nn.Linear(50, 10) shapes).
    # PyTorch default init is kaiming-uniform with bound 1/sqrt(fan_in).
    bound = 1.0 / (IN_F ** 0.5)
    weight = jax.random.uniform(k_w, (OUT_F, IN_F), jnp.float32, -bound, bound)
    bias = jax.random.uniform(k_b, (OUT_F,), jnp.float32, -bound, bound)

    # --- 1) Canonical small-batch check (B=2, f32, single full-extent tile) ---
    B = 2
    x = jax.random.normal(k_x, (B, IN_F), jnp.float32)
    wt, b2 = prepare_params(weight, bias)               # one-time, outside hot path
    out = jax.block_until_ready(lenet_server_side_forward(x, wt, b2))
    ref = _reference_forward(x, weight, bias)
    assert out.shape == (B, OUT_F)
    assert jnp.allclose(out, ref, atol=1e-5, rtol=1e-5)

    # --- 2) Multi-tile path (forced small tile) exercises tiling + Buffered(3) ---
    B2 = 48
    x2 = jax.random.normal(k_x2, (B2, IN_F), jnp.float32)
    out2 = jax.block_until_ready(
        lenet_server_side_forward(x2, wt, b2, tile_rows=16))
    ref2 = _reference_forward(x2, weight, bias)
    assert out2.shape == (B2, OUT_F)
    assert jnp.allclose(out2, ref2, atol=1e-5, rtol=1e-5)

    # --- 3) bf16 activation streaming (producer-side cast), f32 accumulate ---
    wt_bf16, b2_f32 = prepare_params(weight, bias, compute_dtype=jnp.bfloat16)
    out3 = jax.block_until_ready(
        lenet_server_side_forward(x.astype(jnp.bfloat16), wt_bf16, b2_f32))
    assert out3.shape == (B, OUT_F)
    assert out3.dtype == jnp.float32
    assert jnp.allclose(out3, ref, atol=5e-2, rtol=5e-2)

    print("KERNEL_OK")
</pallas_src>

<mosaic_0001>
module attributes {stable_mosaic.version = 11 : i64} {
  func.func @_fc2_kernel(%arg0: i32, %arg1: memref<2x50xf32, #tpu.memory_space<vmem>>, %arg2: memref<50x10xf32, #tpu.memory_space<vmem>>, %arg3: memref<1x10xf32, #tpu.memory_space<vmem>>, %arg4: memref<2x10xf32, #tpu.memory_space<vmem>>) attributes {dimension_semantics = [#tpu.dimension_semantics<parallel>], iteration_bounds = array<i64: 1>, scalar_prefetch = 0 : i64, scratch_operands = 0 : i64, tpu.core_type = #tpu.core_type<tc>, window_params = [{transform_indices = @transform_0, window_bounds = array<i64: 2, 50>}, {pipeline_mode = #tpu.pipeline_mode<synchronous>, transform_indices = @transform_1, window_bounds = array<i64: 50, 10>}, {pipeline_mode = #tpu.pipeline_mode<synchronous>, transform_indices = @transform_2, window_bounds = array<i64: 1, 10>}, {transform_indices = @transform_3, window_bounds = array<i64: 2, 10>}]} {
    %c0 = arith.constant 0 : index
    %c0_0 = arith.constant 0 : index
    %0 = vector.load %arg1[%c0, %c0_0] : memref<2x50xf32, #tpu.memory_space<vmem>>, vector<2x50xf32>
    %c0_1 = arith.constant 0 : index
    %c0_2 = arith.constant 0 : index
    %1 = vector.load %arg2[%c0_1, %c0_2] : memref<50x10xf32, #tpu.memory_space<vmem>>, vector<50x10xf32>
    %cst = arith.constant dense<0.000000e+00> : vector<2x10xf32>
    %2 = tpu.matmul %0, %1, %cst {dimension_numbers = #tpu.dot_dimension_numbers<[1], [0], [0], [1], [0, 0, 1, 1], [], []>} : vector<2x50xf32>, vector<50x10xf32>, vector<2x10xf32> -> vector<2x10xf32>
    %c0_3 = arith.constant 0 : index
    %c0_4 = arith.constant 0 : index
    %3 = vector.load %arg3[%c0_3, %c0_4] : memref<1x10xf32, #tpu.memory_space<vmem>>, vector<1x10xf32>
    %4 = vector.broadcast %3 : vector<1x10xf32> to vector<2x10xf32>
    %5 = arith.addf %2, %4 : vector<2x10xf32>
    %c0_5 = arith.constant 0 : index
    %c0_6 = arith.constant 0 : index
    %6 = vector.load %arg4[%c0_5, %c0_6] : memref<2x10xf32, #tpu.memory_space<vmem>>, vector<2x10xf32>
    tpu.vector_store %arg4[%c0_5, %c0_6], %5 {strides = array<i32>} : memref<2x10xf32, #tpu.memory_space<vmem>>, vector<2x10xf32>,
    return
  }
  func.func @transform_0(%arg0: i32) -> (i32, i32) {
    %c0_i32 = arith.constant 0 : i32
    %c0_i32_0 = arith.constant 0 : i32
    return %arg0, %c0_i32 : i32, i32
  }
  func.func @transform_1(%arg0: i32) -> (i32, i32) {
    %c0_i32 = arith.constant 0 : i32
    %c0_i32_0 = arith.constant 0 : i32
    %c0_i32_1 = arith.constant 0 : i32
    return %c0_i32, %c0_i32_0 : i32, i32
  }
  func.func @transform_2(%arg0: i32) -> (i32, i32) {
    %c0_i32 = arith.constant 0 : i32
    %c0_i32_0 = arith.constant 0 : i32
    %c0_i32_1 = arith.constant 0 : i32
    return %c0_i32, %c0_i32_0 : i32, i32
  }
  func.func @transform_3(%arg0: i32) -> (i32, i32) {
    %c0_i32 = arith.constant 0 : i32
    %c0_i32_0 = arith.constant 0 : i32
    return %arg0, %c0_i32 : i32, i32
  }
}

</mosaic_0001>

<llo_original>
// kernel: tpu_custom_call.1
$region0: #{tpu_custom_call.1}
  #allocation0 [shape = 'u32[]', space=smem, size = 0x4, offset = 0x4, fixed_abs, tag = 'smem constant byte address 0x4 - core index']
  #allocation1 [shape = 'u32[72,128]{1,0:T(1,128)}', space=vmem, size = 0x9000, scoped, tag = 'internal scratch']
  %s0 = inlined_call_operand.vmem [shape: f32[2,50], index: 0, kind: input, shape index: {}]
  %s1 = inlined_call_operand.vmem [shape: f32[50,10], index: 1, kind: input, shape index: {}]
  %s2 = inlined_call_operand.vmem [shape: f32[1,10], index: 2, kind: input, shape index: {}]
  %s3 = inlined_call_operand.hbm [shape: f32[2,10], index: 3, kind: output, shape index: {}]
  %s4 = sld [smem:[#allocation0]]
  $region22: #{tpu_custom_call.1} parent=0
    _
  %s6 = ssub.s32 1, %s4
  %s7 = scalar_select 0, %s6, %s4
  $region1: #{tpu_custom_call.1} parent=0
    #allocation2 [shape = 'u8[1024]{0}', space=vmem, size = 0x400, scoped, tag = 'output window, operand 0, single buffered']
    #allocation3 [shape = 's32[1]{0}', space=sflag, size = 0x4, scoped, tag = 'scoped memory for tpu_custom_call.1']
    %8 = vsyncpa [#allocation3], 0
    // Predicated region
    $region2: #{tpu_custom_call.1} parent=1 // pred_check
      _
    $region3: #{tpu_custom_call.1} parent=1 // pred_check_branch
      %10 = sbr.rel (0) target = $region5
    $region4: #{tpu_custom_call.1} parent=1 // pred_region
      _
    $region5: #{tpu_custom_call.1} parent=1 // pred_fallthru
      _
    // Predicated region
    $region6: #{tpu_custom_call.1} parent=1 // pred_check
      _
    $region7: #{tpu_custom_call.1} parent=1 // pred_check_branch
      %12 = sbr.rel (0) target = $region9
    $region8: #{tpu_custom_call.1} parent=1 // pred_region
      _
    $region9: #{tpu_custom_call.1} parent=1 // pred_fallthru
      _
    // Predicated region
    $region10: #{tpu_custom_call.1} parent=1 // pred_check
      _
    $region11: #{tpu_custom_call.1} parent=1 // pred_check_branch
      %14 = sbr.rel (0) target = $region13
    $region12: #{tpu_custom_call.1} parent=1 // pred_region
      _
    $region13: #{tpu_custom_call.1} parent=1 // pred_fallthru
      _
    %v15 = vld [vmem:[%s0] sm:$0x3]
    %v16 = vld [vmem:[%s1] sm:$0xff]
    %v17 = vld [vmem:[%s1 + $0x8] sm:$0xff]
    %v18 = vld [vmem:[%s1 + $0x10] sm:$0xff]
    %v19 = vld [vmem:[%s1 + $0x18] sm:$0xff]
    %v20 = vld [vmem:[%s1 + $0x20] sm:$0xff]
    %v21 = vld [vmem:[%s1 + $0x28] sm:$0xff]
    %v22 = vld [vmem:[%s1 + $0x30] sm:$0x3]
    %v23 = vld [vmem:[%s2] sm:$0x1]
    %v25 = vperm.slane %v23, 0
    %vm27 = vcmask 408576
    %v29 = vsel %vm27, %v15, 0
    %vm31 = vcmask 1041408
    %v33 = vsel %vm31, %v22, 0
    %35 = vmatpush.msra.mxu0 0.0
    %36 = vmatpush.msra.mxu0 0.0
    %37 = vmatpush.msra.mxu0 0.0
    %38 = vmatpush.msra.mxu0 0.0
    %39 = vmatpush.msra.mxu0 0.0
    %40 = vmatpush.msra.mxu0 0.0
    %41 = vmatpush.msra.mxu0 0.0
    %42 = vmatpush.msra.mxu0 0.0
    %43 = vmatpush.msra.mxu0 0.0
    %44 = vmatpush.msra.mxu0 %v33
    %45 = vmatpush.msra.mxu0 %v21
    %46 = vmatpush.msra.mxu0 %v20
    %47 = vmatpush.msra.mxu0 %v19
    %48 = vmatpush.msra.mxu0 %v18
    %49 = vmatpush.msra.mxu0 %v17
    %50 = vmatpush.msra.mxu0 %v16
    %51 = vmatmul.f32.gmra.mxu0 %v29
    %v52 = vpop.f32.mrf.mxu0
    %v53 = vadd.f32 %v25, %v52
    %54 = vdwg.mxu0
    %vm55 = vcmask 74752
    %56 = vst.msk [vmem:[#allocation2] sm:$0x3] %vm55, %v53
    // Predicated region
    $region14: #{tpu_custom_call.1} parent=1 // pred_check
      _
    $region15: #{tpu_custom_call.1} parent=1 // pred_check_branch
      %58 = sbr.rel (0) target = $region17
    $region16: #{tpu_custom_call.1} parent=1 // pred_region
      %60 = vsyncadd [#allocation3], 0
      %s62 = sshll.u32 [#allocation2], 4
      %s63 = int_to_ptr.vmem [resolvable:$true] %s62
      %s64 = sshll.u32 %s3, 4
      %s65 = int_to_ptr.hbm [resolvable:$true] %s64
      %67 = dma.vmem_to_hbm [thread:$0]  %s63, 32, %s65, [#allocation3]
    $region17: #{tpu_custom_call.1} parent=1 // pred_fallthru
      _
    // Predicated region
    $region18: #{tpu_custom_call.1} parent=1 // pred_check
      _
    $region19: #{tpu_custom_call.1} parent=1 // pred_check_branch
      %69 = sbr.rel (0) target = $region21
    $region20: #{tpu_custom_call.1} parent=1 // pred_region
      %71 = dma.done [#allocation3], 32
    $region21: #{tpu_custom_call.1} parent=1 // pred_fallthru
      _
    %72 = vsyncpa [#allocation3], 1

</llo_original>
